<compile_context>
chip_gen: v7x
topology: tpu7x:2x2x1
jax: 0.10.0
libtpu: 0.0.40
codegen_flags: <defaults>
</compile_context>

<pallas_src>
import functools

import jax
import jax.numpy as jnp
from jax import lax
from jax.experimental import pallas as pl
from jax.experimental.pallas import tpu as pltpu


def _focal_loss_kernel(x_ref, t_ref, out_ref, *,
                       channels, t_s, hw, rows, gamma, alpha,
                       mask_tail, lanes_exact, binary_targets):
    # x_ref:   (nb, C, t_s, 128)  logits tile
    # t_ref:   (nb, t_s, 128)     target tile (native dtype)
    # out_ref: (nb, t_s, 128)     per-batch partial-sum accumulator (resident
    #                             across the spatial grid axis)
    si = pl.program_id(1)

    @pl.when(si == 0)
    def _():
        out_ref[...] = jnp.zeros_like(out_ref)

    # ---- p = softmax(x, channel axis)[:, 1] --------------------------------
    if channels == 2:
        # Binary case: p = sigmoid(x1 - x0), computed stably. One exp total.
        d = x_ref[:, 1].astype(jnp.float32) - x_ref[:, 0].astype(jnp.float32)
        e = jnp.exp(-jnp.abs(d))                     # in (0, 1]
        inv = pl.reciprocal(1.0 + e, approx=True)
        p = jnp.where(d >= 0, inv, e * inv)
    else:
        # Max pass (re-reads channels from VMEM; nothing cached -> no spills).
        m = x_ref[:, 0].astype(jnp.float32)
        for ci in range(1, channels):
            m = jnp.maximum(m, x_ref[:, ci].astype(jnp.float32))
        # Exp/sum pass, re-reading each channel tile from VMEM.
        s = None
        e1 = None
        for ci in range(channels):
            ec = jnp.exp(x_ref[:, ci].astype(jnp.float32) - m)
            if ci == 1:
                e1 = ec
            s = ec if s is None else s + ec
        p = e1 * pl.reciprocal(s, approx=True)

    q = 1.0 - p
    t = t_ref[...].astype(jnp.float32)

    # static gamma: gamma == 2 -> explicit squares (no pow on the EUP)
    if gamma == 2.0:
        w_pos = q * q
        w_neg = p * p
    elif float(gamma).is_integer() and gamma >= 0:
        w_pos = q ** int(gamma)
        w_neg = p ** int(gamma)
    else:
        w_pos = q ** gamma
        w_neg = p ** gamma

    eps = 1e-12
    if binary_targets:
        # Exactly-binary targets: one log instead of two (halves EUP log work).
        pos = t > 0.5
        w = jnp.where(pos, alpha * w_pos, (1.0 - alpha) * w_neg)
        pr = jnp.where(pos, p, q)
        loss = -w * jnp.log(pr + eps)
    else:
        # General (soft-label-safe) form, matches the PyTorch module exactly.
        loss = ((-alpha) * w_pos * (t * jnp.log(p + eps))
                - (1.0 - alpha) * w_neg * ((1.0 - t) * jnp.log(q + eps)))

    if not mask_tail:
        out_ref[...] += loss
    else:
        last = pl.num_programs(1) - 1

        @pl.when(si != last)
        def _():
            out_ref[...] += loss

        @pl.when(si == last)
        def _():
            row = lax.broadcasted_iota(jnp.int32, (1, t_s, 128), 1)
            if lanes_exact:
                valid = (si * t_s + row) < rows
            else:
                lane = lax.broadcasted_iota(jnp.int32, (1, t_s, 128), 2)
                valid = ((si * t_s + row) * 128 + lane) < hw
            out_ref[...] += jnp.where(valid, loss, 0.0)


def focal_loss_pallas(inputs, target, gamma=2.0, alpha=0.25,
                      block_rows=1024, binary_targets=False,
                      vmem_budget_bytes=24 * 1024 * 1024):
    """inputs: (N, C, H, W); target: (N, H, W) any dtype. Returns scalar mean loss.

    Set binary_targets=True only if targets are exactly 0/1 (enables the
    single-log fast path); the default keeps soft-label semantics.
    """
    n, c, h, w = inputs.shape
    assert c >= 2, "FocalLoss uses the probability of class 1 -> need C >= 2"
    hw = h * w
    rows = pl.cdiv(hw, 128)          # number of 128-lane rows per batch
    hw128 = rows * 128

    x_b = inputs.dtype.itemsize
    t_b = target.dtype.itemsize

    # VMEM bytes per (row of 128 lanes) per batch: x double-buffered, t
    # double-buffered, f32 resident output (count 2x for safety).
    per_row = 128 * (2 * c * x_b + 2 * t_b + 2 * 4)
    max_rows = max(1, vmem_budget_bytes // per_row)
    block_rows = max(1, min(int(block_rows), max_rows))

    if rows <= block_rows:
        t_s = rows                                   # full spatial dim per tile
        nb = max(1, min(n, block_rows // max(rows, 1)))   # batch-block small HW
    else:
        t_s = max(8, (block_rows // 8) * 8)          # (8,128) tiling rule
        nb = 1

    n_b_blocks = pl.cdiv(n, nb)
    n_s_tiles = pl.cdiv(rows, t_s)
    padded_hw = n_s_tiles * t_s * 128
    assert padded_hw < 2 ** 31, "int32 tail-mask position would overflow"
    mask_tail = padded_hw != hw
    lanes_exact = (hw % 128 == 0)

    # Contiguous reshapes; pad only to a multiple of 128 lanes (required by the
    # (..., 128) layout). No padding to a multiple of the tile size: ragged
    # last blocks are handled by Pallas + the in-kernel tail mask.
    x = inputs.reshape(n, c, hw)
    t = target.reshape(n, hw)
    if hw128 != hw:
        pad = hw128 - hw
        x = jnp.pad(x, ((0, 0), (0, 0), (0, pad)))
        t = jnp.pad(t, ((0, 0), (0, pad)))
    x = x.reshape(n, c, rows, 128)
    t = t.reshape(n, rows, 128)

    kernel = functools.partial(
        _focal_loss_kernel,
        channels=c, t_s=t_s, hw=hw, rows=rows,
        gamma=float(gamma), alpha=float(alpha),
        mask_tail=mask_tail, lanes_exact=lanes_exact,
        binary_targets=bool(binary_targets),
    )

    # Explicit VMEM limit (kept well under v7x's 64 MiB physical ceiling).
    x_block = 2 * nb * c * t_s * 128 * x_b
    t_block = 2 * nb * t_s * 128 * t_b
    o_block = 2 * nb * t_s * 128 * 4
    need = x_block + t_block + o_block
    vmem_limit = int(min(60 * 2 ** 20, max(16 * 2 ** 20, need + need // 2 + (2 << 20))))

    n_exp = 1 if c == 2 else c
    n_log = 1 if binary_targets else 2
    cost = pl.CostEstimate(
        flops=int(12 * c * n * hw),
        transcendentals=int((n_exp + n_log + 1) * n * hw),
        bytes_accessed=int(n * c * hw * x_b + n * hw * t_b + n * t_s * 128 * 4),
    )

    partials = pl.pallas_call(
        kernel,
        out_shape=jax.ShapeDtypeStruct((n, t_s, 128), jnp.float32),
        grid_spec=pltpu.PrefetchScalarGridSpec(
            num_scalar_prefetch=0,
            grid=(n_b_blocks, n_s_tiles),
            in_specs=[
                pl.BlockSpec((nb, c, t_s, 128), lambda bi, si: (bi, 0, si, 0)),
                pl.BlockSpec((nb, t_s, 128), lambda bi, si: (bi, si, 0)),
            ],
            out_specs=pl.BlockSpec((nb, t_s, 128), lambda bi, si: (bi, 0, 0)),
        ),
        compiler_params=pltpu.CompilerParams(
            dimension_semantics=("parallel", "arbitrary"),
            vmem_limit_bytes=vmem_limit),
        cost_estimate=cost,
    )(x, t)

    # Tiny final reduction + mean (lane-dense partials -> scalar).
    return jnp.sum(partials) / jnp.float32(n * hw)


def focal_loss_ref(inputs, target, gamma=2.0, alpha=0.25):
    t = target.astype(jnp.float32)
    pt = jax.nn.softmax(inputs.astype(jnp.float32), axis=1)
    p = pt[:, 1]
    eps = 1e-12
    loss = (-alpha * (1.0 - p) ** gamma * (t * jnp.log(p + eps))
            - (1.0 - alpha) * p ** gamma * ((1.0 - t) * jnp.log(1.0 - p + eps)))
    return jnp.mean(loss)


if __name__ == "__main__":
    key = jax.random.PRNGKey(0)
    k1, k2, k3, k4, k5, k6, k7, k8 = jax.random.split(key, 8)

    # Tolerances are slightly loose because pl.reciprocal(approx=True) perturbs
    # p by a few ULPs; fine for a mean loss.
    RTOL, ATOL = 2e-3, 2e-4

    # 1) Primary shape implied by the module: NCHW logits, softmax over C.
    N, C, H, W = 2, 4, 16, 16
    x = jax.random.normal(k1, (N, C, H, W), dtype=jnp.float32)
    t = jax.random.bernoulli(k2, p=0.5, shape=(N, H, W)).astype(jnp.float32)
    out = jax.block_until_ready(focal_loss_pallas(x, t, gamma=2, alpha=0.25))
    ref = focal_loss_ref(x, t)
    assert jnp.allclose(out, ref, rtol=RTOL, atol=ATOL), (out, ref)

    # 2) C == 2 sigmoid fast path + ragged lane tail (H*W not multiple of 128)
    #    + binary single-log path.
    x2 = jax.random.normal(k3, (1, 2, 20, 37), dtype=jnp.float32)
    t2 = jax.random.bernoulli(k4, p=0.5, shape=(1, 20, 37)).astype(jnp.float32)
    out2 = jax.block_until_ready(focal_loss_pallas(x2, t2, binary_targets=True))
    ref2 = focal_loss_ref(x2, t2)
    assert jnp.allclose(out2, ref2, rtol=RTOL, atol=ATOL), (out2, ref2)

    # 3) Multi-tile spatial accumulation with a ragged last row-block
    #    (lanes_exact mask path) and soft labels.
    x3 = jax.random.normal(k5, (2, 3, 48, 48), dtype=jnp.float32)
    t3 = jax.random.uniform(k6, (2, 48, 48), dtype=jnp.float32)
    out3 = jax.block_until_ready(focal_loss_pallas(x3, t3, block_rows=8))
    ref3 = focal_loss_ref(x3, t3)
    assert jnp.allclose(out3, ref3, rtol=RTOL, atol=ATOL), (out3, ref3)

    # 4) Batch-blocked small-HW path with a ragged last batch block.
    x4 = jax.random.normal(k7, (3, 4, 16, 16), dtype=jnp.float32)
    t4 = jax.random.bernoulli(k8, p=0.5, shape=(3, 16, 16)).astype(jnp.float32)
    out4 = jax.block_until_ready(focal_loss_pallas(x4, t4, block_rows=4))
    ref4 = focal_loss_ref(x4, t4)
    assert jnp.allclose(out4, ref4, rtol=RTOL, atol=ATOL), (out4, ref4)

    print("KERNEL_OK")
</pallas_src>

<mosaic_0001>
module attributes {stable_mosaic.version = 11 : i64} {
  func.func @_focal_loss_kernel(%arg0: i32, %arg1: i32, %arg2: memref<2x4x2x128xf32, #tpu.memory_space<vmem>>, %arg3: memref<2x2x128xf32, #tpu.memory_space<vmem>>, %arg4: memref<2x2x128xf32, #tpu.memory_space<vmem>>) attributes {dimension_semantics = [#tpu.dimension_semantics<parallel>, #tpu.dimension_semantics<arbitrary>], iteration_bounds = array<i64: 1, 1>, scalar_prefetch = 0 : i64, scratch_operands = 0 : i64, tpu.core_type = #tpu.core_type<tc>, window_params = [{transform_indices = @transform_0, window_bounds = array<i64: 2, 4, 2, 128>}, {transform_indices = @transform_1, window_bounds = array<i64: 2, 2, 128>}, {transform_indices = @transform_2, window_bounds = array<i64: 2, 2, 128>}]} {
    %c0_i32 = arith.constant 0 : i32
    %0 = arith.cmpi eq, %arg1, %c0_i32 : i32
    %1 = arith.extui %0 : i1 to i32
    %c0_i32_0 = arith.constant 0 : i32
    %2 = arith.cmpi ne, %1, %c0_i32_0 : i32
    scf.if %2 {
      %cst_43 = arith.constant 0.000000e+00 : f32
      %60 = vector.broadcast %cst_43 : f32 to vector<2x2x128xf32>
      %c0_44 = arith.constant 0 : index
      %c0_45 = arith.constant 0 : index
      %c0_46 = arith.constant 0 : index
      %61 = vector.load %arg4[%c0_44, %c0_45, %c0_46] : memref<2x2x128xf32, #tpu.memory_space<vmem>>, vector<2x2x128xf32>
      tpu.vector_store %arg4[%c0_44, %c0_45, %c0_46], %60 {strides = array<i32>} : memref<2x2x128xf32, #tpu.memory_space<vmem>>, vector<2x2x128xf32>,
    } else {
    }
    %c0 = arith.constant 0 : index
    %c0_1 = arith.constant 0 : index
    %c0_2 = arith.constant 0 : index
    %c0_3 = arith.constant 0 : index
    %3 = vector.load %arg2[%c0, %c0_1, %c0_2, %c0_3] : memref<2x4x2x128xf32, #tpu.memory_space<vmem>>, vector<2x1x2x128xf32>
    %4 = vector.shape_cast %3 : vector<2x1x2x128xf32> to vector<2x2x128xf32>
    %c0_4 = arith.constant 0 : index
    %c1 = arith.constant 1 : index
    %c0_5 = arith.constant 0 : index
    %c0_6 = arith.constant 0 : index
    %5 = vector.load %arg2[%c0_4, %c1, %c0_5, %c0_6] : memref<2x4x2x128xf32, #tpu.memory_space<vmem>>, vector<2x1x2x128xf32>
    %6 = vector.shape_cast %5 : vector<2x1x2x128xf32> to vector<2x2x128xf32>
    %7 = arith.maximumf %4, %6 : vector<2x2x128xf32>
    %c0_7 = arith.constant 0 : index
    %c2 = arith.constant 2 : index
    %c0_8 = arith.constant 0 : index
    %c0_9 = arith.constant 0 : index
    %8 = vector.load %arg2[%c0_7, %c2, %c0_8, %c0_9] : memref<2x4x2x128xf32, #tpu.memory_space<vmem>>, vector<2x1x2x128xf32>
    %9 = vector.shape_cast %8 : vector<2x1x2x128xf32> to vector<2x2x128xf32>
    %10 = arith.maximumf %7, %9 : vector<2x2x128xf32>
    %c0_10 = arith.constant 0 : index
    %c3 = arith.constant 3 : index
    %c0_11 = arith.constant 0 : index
    %c0_12 = arith.constant 0 : index
    %11 = vector.load %arg2[%c0_10, %c3, %c0_11, %c0_12] : memref<2x4x2x128xf32, #tpu.memory_space<vmem>>, vector<2x1x2x128xf32>
    %12 = vector.shape_cast %11 : vector<2x1x2x128xf32> to vector<2x2x128xf32>
    %13 = arith.maximumf %10, %12 : vector<2x2x128xf32>
    %c0_13 = arith.constant 0 : index
    %c0_14 = arith.constant 0 : index
    %c0_15 = arith.constant 0 : index
    %c0_16 = arith.constant 0 : index
    %14 = vector.load %arg2[%c0_13, %c0_14, %c0_15, %c0_16] : memref<2x4x2x128xf32, #tpu.memory_space<vmem>>, vector<2x1x2x128xf32>
    %15 = vector.shape_cast %14 : vector<2x1x2x128xf32> to vector<2x2x128xf32>
    %16 = arith.subf %15, %13 : vector<2x2x128xf32>
    %17 = math.exp %16 : vector<2x2x128xf32>
    %c0_17 = arith.constant 0 : index
    %c1_18 = arith.constant 1 : index
    %c0_19 = arith.constant 0 : index
    %c0_20 = arith.constant 0 : index
    %18 = vector.load %arg2[%c0_17, %c1_18, %c0_19, %c0_20] : memref<2x4x2x128xf32, #tpu.memory_space<vmem>>, vector<2x1x2x128xf32>
    %19 = vector.shape_cast %18 : vector<2x1x2x128xf32> to vector<2x2x128xf32>
    %20 = arith.subf %19, %13 : vector<2x2x128xf32>
    %21 = math.exp %20 : vector<2x2x128xf32>
    %22 = arith.addf %17, %21 : vector<2x2x128xf32>
    %c0_21 = arith.constant 0 : index
    %c2_22 = arith.constant 2 : index
    %c0_23 = arith.constant 0 : index
    %c0_24 = arith.constant 0 : index
    %23 = vector.load %arg2[%c0_21, %c2_22, %c0_23, %c0_24] : memref<2x4x2x128xf32, #tpu.memory_space<vmem>>, vector<2x1x2x128xf32>
    %24 = vector.shape_cast %23 : vector<2x1x2x128xf32> to vector<2x2x128xf32>
    %25 = arith.subf %24, %13 : vector<2x2x128xf32>
    %26 = math.exp %25 : vector<2x2x128xf32>
    %27 = arith.addf %22, %26 : vector<2x2x128xf32>
    %c0_25 = arith.constant 0 : index
    %c3_26 = arith.constant 3 : index
    %c0_27 = arith.constant 0 : index
    %c0_28 = arith.constant 0 : index
    %28 = vector.load %arg2[%c0_25, %c3_26, %c0_27, %c0_28] : memref<2x4x2x128xf32, #tpu.memory_space<vmem>>, vector<2x1x2x128xf32>
    %29 = vector.shape_cast %28 : vector<2x1x2x128xf32> to vector<2x2x128xf32>
    %30 = arith.subf %29, %13 : vector<2x2x128xf32>
    %31 = math.exp %30 : vector<2x2x128xf32>
    %32 = arith.addf %27, %31 : vector<2x2x128xf32>
    %33 = tpu.reciprocal %32 {approx = true} : vector<2x2x128xf32> -> vector<2x2x128xf32>
    %34 = arith.mulf %21, %33 : vector<2x2x128xf32>
    %cst = arith.constant 1.000000e+00 : f32
    %35 = vector.broadcast %cst : f32 to vector<2x2x128xf32>
    %36 = arith.subf %35, %34 : vector<2x2x128xf32>
    %c0_29 = arith.constant 0 : index
    %c0_30 = arith.constant 0 : index
    %c0_31 = arith.constant 0 : index
    %37 = vector.load %arg3[%c0_29, %c0_30, %c0_31] : memref<2x2x128xf32, #tpu.memory_space<vmem>>, vector<2x2x128xf32>
    %38 = arith.mulf %36, %36 : vector<2x2x128xf32>
    %39 = arith.mulf %34, %34 : vector<2x2x128xf32>
    %cst_32 = arith.constant -2.500000e-01 : f32
    %40 = vector.broadcast %cst_32 : f32 to vector<2x2x128xf32>
    %41 = arith.mulf %40, %38 : vector<2x2x128xf32>
    %cst_33 = arith.constant 9.99999996E-13 : f32
    %42 = vector.broadcast %cst_33 : f32 to vector<2x2x128xf32>
    %43 = arith.addf %34, %42 : vector<2x2x128xf32>
    %44 = math.log %43 : vector<2x2x128xf32>
    %45 = arith.mulf %37, %44 : vector<2x2x128xf32>
    %46 = arith.mulf %41, %45 : vector<2x2x128xf32>
    %cst_34 = arith.constant 7.500000e-01 : f32
    %47 = vector.broadcast %cst_34 : f32 to vector<2x2x128xf32>
    %48 = arith.mulf %47, %39 : vector<2x2x128xf32>
    %cst_35 = arith.constant 1.000000e+00 : f32
    %49 = vector.broadcast %cst_35 : f32 to vector<2x2x128xf32>
    %50 = arith.subf %49, %37 : vector<2x2x128xf32>
    %cst_36 = arith.constant 9.99999996E-13 : f32
    %51 = vector.broadcast %cst_36 : f32 to vector<2x2x128xf32>
    %52 = arith.addf %36, %51 : vector<2x2x128xf32>
    %53 = math.log %52 : vector<2x2x128xf32>
    %54 = arith.mulf %50, %53 : vector<2x2x128xf32>
    %55 = arith.mulf %48, %54 : vector<2x2x128xf32>
    %56 = arith.subf %46, %55 : vector<2x2x128xf32>
    %c0_37 = arith.constant 0 : index
    %c0_38 = arith.constant 0 : index
    %c0_39 = arith.constant 0 : index
    %57 = vector.load %arg4[%c0_37, %c0_38, %c0_39] : memref<2x2x128xf32, #tpu.memory_space<vmem>>, vector<2x2x128xf32>
    %58 = arith.addf %57, %56 : vector<2x2x128xf32>
    %c0_40 = arith.constant 0 : index
    %c0_41 = arith.constant 0 : index
    %c0_42 = arith.constant 0 : index
    %59 = vector.load %arg4[%c0_40, %c0_41, %c0_42] : memref<2x2x128xf32, #tpu.memory_space<vmem>>, vector<2x2x128xf32>
    tpu.vector_store %arg4[%c0_40, %c0_41, %c0_42], %58 {strides = array<i32>} : memref<2x2x128xf32, #tpu.memory_space<vmem>>, vector<2x2x128xf32>,
    return
  }
  func.func @transform_0(%arg0: i32, %arg1: i32) -> (i32, i32, i32, i32) {
    %c0_i32 = arith.constant 0 : i32
    %c0_i32_0 = arith.constant 0 : i32
    %c0_i32_1 = arith.constant 0 : i32
    return %arg0, %c0_i32, %arg1, %c0_i32_0 : i32, i32, i32, i32
  }
  func.func @transform_1(%arg0: i32, %arg1: i32) -> (i32, i32, i32) {
    %c0_i32 = arith.constant 0 : i32
    %c0_i32_0 = arith.constant 0 : i32
    return %arg0, %arg1, %c0_i32 : i32, i32, i32
  }
  func.func @transform_2(%arg0: i32, %arg1: i32) -> (i32, i32, i32) {
    %c0_i32 = arith.constant 0 : i32
    %c0_i32_0 = arith.constant 0 : i32
    %c0_i32_1 = arith.constant 0 : i32
    return %arg0, %c0_i32, %c0_i32_0 : i32, i32, i32
  }
}

</mosaic_0001>

<llo_original>
// kernel: tpu_custom_call.1
$region0: #{tpu_custom_call.1}
  #allocation0 [shape = 'u32[]', space=smem, size = 0x4, offset = 0x4, fixed_abs, tag = 'smem constant byte address 0x4 - core index']
  #allocation1 [shape = 'u32[144,128]{1,0:T(1,128)}', space=vmem, size = 0x12000, scoped, tag = 'internal scratch']
  %s0 = inlined_call_operand.hbm [shape: f32[2,4,2,128], index: 0, kind: input, shape index: {}]
  %s1 = inlined_call_operand.hbm [shape: f32[2,2,128], index: 1, kind: input, shape index: {}]
  %s2 = inlined_call_operand.hbm [shape: f32[2,2,128], index: 2, kind: output, shape index: {}]
  %s3 = sld [smem:[#allocation0]]
  $region30: #{tpu_custom_call.1} parent=0
    _
  %s5 = ssub.s32 1, %s3
  %s6 = scalar_select 0, %s5, %s3
  $region1: #{tpu_custom_call.1} parent=0
    #allocation2 [shape = 'u8[8192]{0}', space=vmem, size = 0x2000, scoped, tag = 'input window, operand 0, single buffered']
    #allocation3 [shape = 's32[1]{0}', space=sflag, size = 0x4, scoped, tag = 'scoped memory for tpu_custom_call.1']
    #allocation4 [shape = 's32[1]{0}', space=sflag, size = 0x4, scoped, tag = 'scoped memory for tpu_custom_call.1']
    #allocation5 [shape = 'u8[2048]{0}', space=vmem, size = 0x800, scoped, tag = 'input window, operand 1, single buffered']
    #allocation6 [shape = 's32[1]{0}', space=sflag, size = 0x4, scoped, tag = 'scoped memory for tpu_custom_call.1']
    #allocation7 [shape = 'u8[2048]{0}', space=vmem, size = 0x800, scoped, tag = 'output window, operand 0, single buffered']
    %7 = vsyncpa [#allocation3], 0
    %8 = vsyncpa [#allocation6], 0
    %9 = vsyncpa [#allocation4], 0
    // Predicated region
    $region2: #{tpu_custom_call.1} parent=1 // pred_check
      _
    $region3: #{tpu_custom_call.1} parent=1 // pred_check_branch
      %11 = sbr.rel (0) target = $region5
    $region4: #{tpu_custom_call.1} parent=1 // pred_region
      %s13 = ssub.s32 256, 256
      %14 = vsyncadd [#allocation3], %s13
      %s15 = sshll.u32 [#allocation2], 4
      %s16 = int_to_ptr.vmem [resolvable:$true] %s15
      %21 = dma.hbm_to_vmem [thread:$0]  %s0, 256, %s16, [#allocation3], 32, 32, 2
    $region5: #{tpu_custom_call.1} parent=1 // pred_fallthru
      _
    // Predicated region
    $region6: #{tpu_custom_call.1} parent=1 // pred_check
      _
    $region7: #{tpu_custom_call.1} parent=1 // pred_check_branch
      %23 = sbr.rel (0) target = $region9
    $region8: #{tpu_custom_call.1} parent=1 // pred_region
      %s25 = ssub.s32 64, 64
      %26 = vsyncadd [#allocation6], %s25
      %s27 = sshll.u32 [#allocation5], 4
      %s28 = int_to_ptr.vmem [resolvable:$true] %s27
      %33 = dma.hbm_to_vmem [thread:$0]  %s1, 64, %s28, [#allocation6], 32, 32, 2
    $region9: #{tpu_custom_call.1} parent=1 // pred_fallthru
      _
    // Predicated region
    $region10: #{tpu_custom_call.1} parent=1 // pred_check
      _
    $region11: #{tpu_custom_call.1} parent=1 // pred_check_branch
      %35 = sbr.rel (0) target = $region13
    $region12: #{tpu_custom_call.1} parent=1 // pred_region
      %36 = dma.done [#allocation3], 256
    $region13: #{tpu_custom_call.1} parent=1 // pred_fallthru
      _
    // Predicated region
    $region14: #{tpu_custom_call.1} parent=1 // pred_check
      _
    $region15: #{tpu_custom_call.1} parent=1 // pred_check_branch
      %38 = sbr.rel (0) target = $region17
    $region16: #{tpu_custom_call.1} parent=1 // pred_region
      %39 = dma.done [#allocation6], 64
    $region17: #{tpu_custom_call.1} parent=1 // pred_fallthru
      _
    %p40 = scmp.eq.s32.totalorder 0, 0
    // Predicated region
    $region18: #{tpu_custom_call.1} parent=1 // pred_check
      %p41 = pneg %p40
    $region19: #{tpu_custom_call.1} parent=1 // pred_check_branch
      %43 = sbr.rel (%p41) target = $region21
    $region20: #{tpu_custom_call.1} parent=1 // pred_region
      %44 = vst [vmem:[#allocation7] sm:$0x3] 0.0
      %45 = vst [vmem:[#allocation7 + $0x2] sm:$0x3] 0.0
    $region21: #{tpu_custom_call.1} parent=1 // pred_fallthru
      _
    %v46 = vld [vmem:[#allocation2] sm:$0x3]
    %v47 = vld [vmem:[#allocation2 + $0x8] sm:$0x3]
    %s48 = scalar_lea.vmem [#allocation2], 2
    %v49 = vld [vmem:[%s48] sm:$0x3]
    %v50 = vld [vmem:[%s48 + $0x8] sm:$0x3]
    %v51 = vmax.f32 %v46, %v49
    %v52 = vmax.f32 %v47, %v50
    %s53 = scalar_lea.vmem [#allocation2], 4
    %v54 = vld [vmem:[%s53] sm:$0x3]
    %v55 = vld [vmem:[%s53 + $0x8] sm:$0x3]
    %v56 = vmax.f32 %v51, %v54
    %v57 = vmax.f32 %v52, %v55
    %s58 = scalar_lea.vmem [#allocation2], 6
    %v59 = vld [vmem:[%s58] sm:$0x3]
    %v60 = vld [vmem:[%s58 + $0x8] sm:$0x3]
    %v61 = vmax.f32 %v56, %v59
    %v62 = vmax.f32 %v57, %v60
    %v63 = vsub.f32 %v46, %v61
    %v64 = vsub.f32 %v47, %v62
    %v65 = vmul.f32 %v63, 1.442695
    %v66 = vpow.pop %v65
    %v67 = vmul.f32 %v64, 1.442695
    %v68 = vpow.pop %v67
    %v69 = vsub.f32 %v49, %v61
    %v70 = vsub.f32 %v50, %v62
    %v71 = vmul.f32 %v69, 1.442695
    %v72 = vpow.pop %v71
    %v73 = vmul.f32 %v70, 1.442695
    %v74 = vpow.pop %v73
    %v75 = vadd.f32 %v66, %v72
    %v76 = vadd.f32 %v68, %v74
    %v77 = vsub.f32 %v54, %v61
    %v78 = vsub.f32 %v55, %v62
    %v79 = vmul.f32 %v77, 1.442695
    %v80 = vpow.pop %v79
    %v81 = vmul.f32 %v78, 1.442695
    %v82 = vpow.pop %v81
    %v83 = vadd.f32 %v75, %v80
    %v84 = vadd.f32 %v76, %v82
    %v85 = vsub.f32 %v59, %v61
    %v86 = vsub.f32 %v60, %v62
    %v87 = vmul.f32 %v85, 1.442695
    %v88 = vpow.pop %v87
    %v89 = vmul.f32 %v86, 1.442695
    %v90 = vpow.pop %v89
    %v91 = vadd.f32 %v83, %v88
    %v92 = vadd.f32 %v84, %v90
    %v93 = vrcp.pop %v91
    %v94 = vrcp.pop %v92
    %v95 = vmul.f32 %v72, %v93
    %v96 = vmul.f32 %v74, %v94
    %v97 = vsub.f32 1.0, %v95
    %v98 = vsub.f32 1.0, %v96
    %v99 = vld [vmem:[#allocation5] sm:$0x3]
    %v100 = vld [vmem:[#allocation5 + $0x2] sm:$0x3]
    %v101 = vmul.f32 %v97, %v97
    %v102 = vmul.f32 %v98, %v98
    %v103 = vmul.f32 %v95, %v95
    %v104 = vmul.f32 %v96, %v96
    %v105 = vmul.f32 %v101, -0.25
    %v106 = vmul.f32 %v102, -0.25
    %v107 = vadd.f32 %v95, 1e-12
    %v108 = vadd.f32 %v96, 1e-12
    %v109 = vlog2.pop %v107
    %v110 = vmul.f32 %v109, 0.6931472
    %v111 = vlog2.pop %v108
    %v112 = vmul.f32 %v111, 0.6931472
    %v113 = vmul.f32 %v99, %v110
    %v114 = vmul.f32 %v100, %v112
    %v115 = vmul.f32 %v105, %v113
    %v116 = vmul.f32 %v106, %v114
    %v117 = vmul.f32 %v103, 0.75
    %v118 = vmul.f32 %v104, 0.75
    %v119 = vsub.f32 1.0, %v99
    %v120 = vsub.f32 1.0, %v100
    %v121 = vadd.f32 %v97, 1e-12
    %v122 = vadd.f32 %v98, 1e-12
    %v123 = vlog2.pop %v121
    %v124 = vmul.f32 %v123, 0.6931472
    %v125 = vlog2.pop %v122
    %v126 = vmul.f32 %v125, 0.6931472
    %v127 = vmul.f32 %v119, %v124
    %v128 = vmul.f32 %v120, %v126
    %v129 = vmul.f32 %v117, %v127
    %v130 = vmul.f32 %v118, %v128
    %v131 = vsub.f32 %v115, %v129
    %v132 = vsub.f32 %v116, %v130
    %v133 = vld [vmem:[#allocation7] sm:$0x3]
    %v134 = vld [vmem:[#allocation7 + $0x2] sm:$0x3]
    %v135 = vadd.f32 %v133, %v131
    %v136 = vadd.f32 %v134, %v132
    %137 = vst [vmem:[#allocation7] sm:$0x3] %v135
    %138 = vst [vmem:[#allocation7 + $0x2] sm:$0x3] %v136
    // Predicated region
    $region22: #{tpu_custom_call.1} parent=1 // pred_check
      _
    $region23: #{tpu_custom_call.1} parent=1 // pred_check_branch
      %140 = sbr.rel (0) target = $region25
    $region24: #{tpu_custom_call.1} parent=1 // pred_region
      %s142 = ssub.s32 64, 64
      %143 = vsyncadd [#allocation4], %s142
      %s144 = sshll.u32 [#allocation7], 4
      %s145 = int_to_ptr.vmem [resolvable:$true] %s144
      %150 = dma.vmem_to_hbm [thread:$0]  %s145, 64, %s2, [#allocation4], 32, 32, 2
    $region25: #{tpu_custom_call.1} parent=1 // pred_fallthru
      _
    // Predicated region
    $region26: #{tpu_custom_call.1} parent=1 // pred_check
      _
    $region27: #{tpu_custom_call.1} parent=1 // pred_check_branch
      %152 = sbr.rel (0) target = $region29
    $region28: #{tpu_custom_call.1} parent=1 // pred_region
      %153 = dma.done [#allocation4], 64
    $region29: #{tpu_custom_call.1} parent=1 // pred_fallthru
      _
    %154 = vsyncpa [#allocation3], 1
    %155 = vsyncpa [#allocation6], 1
    %156 = vsyncpa [#allocation4], 1

</llo_original>
